<compile_context>
chip_gen: v5e
topology: v5e:2x2
jax: 0.10.0
libtpu: 0.0.40
codegen_flags: <defaults>
</compile_context>

<pallas_src>
import jax
import jax.numpy as jnp
from jax.experimental import pallas as pl
from jax.experimental.pallas import tpu as pltpu

HIDDEN = 64


def _round_up(x, m):
    return ((x + m - 1) // m) * m


def _choose_tiling(batch, block_b):
    """Pick (batch_tile, padded_batch).

    Small batches -> one block of round_up(batch, 8) rows.
    Larger batches -> tiles that are multiples of 128 (keeps the (1, tb) output
    block lane-dense), at least two blocks (v7x has 2 TensorCores), preferring
    a tile that divides the batch exactly so no jnp.pad copy is needed.
    """
    if batch <= 256:
        tb = _round_up(batch, 8)
        return tb, tb
    target = max(128, min(block_b, _round_up(-(-batch // 2), 128)))
    for tb in range(target, 127, -128):
        if batch % tb == 0:                 # exact split: no padding copy
            return tb, batch
    return target, _round_up(batch, target)


def _disc_kernel(s_ref, a_ref, w1s_ref, w1a_ref, b1_ref, w2_ref, b2_ref,
                 w3_ref, b3_ref, o_ref):
    # Feature-major: put the batch on the lane axis.  The transposes are XLU
    # work, which is otherwise idle in this kernel.
    s_t = jnp.transpose(s_ref[...]).astype(jnp.bfloat16)   # (state_dim, TB)
    a_t = jnp.transpose(a_ref[...]).astype(jnp.bfloat16)   # (action_dim, TB)

    # l1 on [state, action]: W1 @ sa^T == W1s @ s^T + W1a @ a^T
    h1 = (jnp.dot(w1s_ref[...], s_t, preferred_element_type=jnp.float32)
          + jnp.dot(w1a_ref[...], a_t, preferred_element_type=jnp.float32)
          + b1_ref[...])                                    # (64, TB) f32
    h1 = jnp.tanh(h1)

    # l2 + tanh
    h2 = jnp.dot(w2_ref[...], h1.astype(jnp.bfloat16),
                 preferred_element_type=jnp.float32) + b2_ref[...]
    h2 = jnp.tanh(h2)                                       # (64, TB)

    # l3 + sigmoid (exp on EUP, approximate reciprocal on EUP).
    logits = jnp.dot(w3_ref[...], h2.astype(jnp.bfloat16),
                     preferred_element_type=jnp.float32) + b3_ref[...]  # (1, TB)
    o_ref[...] = pl.reciprocal(1.0 + jnp.exp(-logits),
                               approx=True).astype(o_ref.dtype)


def discriminator_forward(state, action, params, *, block_b=2048):
    """state: (B, state_dim) f32, action: (B, action_dim) f32 -> (B, 1) f32."""
    w1s, w1a, b1, w2, b2, w3, b3 = params
    B, state_dim = state.shape
    action_dim = action.shape[1]

    tb, padded_b = _choose_tiling(B, block_b)
    if padded_b != B:
        pad = padded_b - B
        state = jnp.pad(state, ((0, pad), (0, 0)))
        action = jnp.pad(action, ((0, pad), (0, 0)))
    num_blocks = padded_b // tb

    batched_in = lambda dim: pl.BlockSpec((tb, dim), lambda i: (i, 0))
    resident = lambda shape: pl.BlockSpec(shape, lambda i: (0, 0))

    # Advisory cost estimate for the XLA scheduler.
    flops = 2 * padded_b * ((state_dim + action_dim) * HIDDEN
                            + HIDDEN * HIDDEN + HIDDEN * 1)
    transcendentals = padded_b * (2 * HIDDEN + 2)        # tanh x2, exp, rcp
    weight_bytes = ((state_dim + action_dim) * HIDDEN + HIDDEN * HIDDEN + HIDDEN) * 2
    bias_bytes = (2 * HIDDEN + 1) * 4
    io_bytes = padded_b * (state_dim + action_dim + 1) * 4
    cost = pl.CostEstimate(flops=flops, transcendentals=transcendentals,
                           bytes_accessed=weight_bytes + bias_bytes + io_bytes)

    # VMEM budget: double-buffered (state, action, out) tiles + f32 in-kernel
    # intermediates + resident weights; ~2.5 MiB at tb=2048, safe on v7x (64 MiB).
    block_bytes = tb * (state_dim + action_dim + 1) * 4
    scratch_bytes = tb * HIDDEN * 4 * 6
    vmem_limit = min(32 << 20,
                     max(4 << 20, 2 * block_bytes + scratch_bytes
                         + weight_bytes + bias_bytes + (1 << 20)))

    out = pl.pallas_call(
        _disc_kernel,
        out_shape=jax.ShapeDtypeStruct((1, padded_b), jnp.float32),
        grid=(num_blocks,),
        in_specs=[
            batched_in(state_dim),          # state tile  (tb, state_dim)
            batched_in(action_dim),         # action tile (tb, action_dim)
            resident(w1s.shape), resident(w1a.shape), resident(b1.shape),
            resident(w2.shape), resident(b2.shape),
            resident(w3.shape), resident(b3.shape),
        ],
        out_specs=pl.BlockSpec((1, tb), lambda i: (0, i)),   # lane-dense row
        compiler_params=pltpu.CompilerParams(
            # "parallel" lets the batch axis shard across TensorCores on v7x;
            # measured no-op on single-TC v5e/v6e.
            dimension_semantics=("parallel",),
            vmem_limit_bytes=vmem_limit,
        ),
        cost_estimate=cost,
    )(state, action, w1s, w1a, b1, w2, b2, w3, b3)

    return out[0, :B].reshape(B, 1)


def init_discriminator_params(key, state_dim, action_dim, hidden=HIDDEN):
    """nn.Linear-style init. Weights stored transposed (out, in) in bf16; W1 is
    pre-split into its state / action column blocks; biases stay f32 shaped
    (out, 1) so they broadcast along the lane (batch) axis."""
    ks = jax.random.split(key, 6)

    def linear(kw, kb, fan_in, fan_out):
        bound = 1.0 / jnp.sqrt(jnp.float32(fan_in))
        w = jax.random.uniform(kw, (fan_out, fan_in), jnp.float32, -bound, bound)
        b = jax.random.uniform(kb, (fan_out, 1), jnp.float32, -bound, bound)
        return w, b

    w1, b1 = linear(ks[0], ks[1], state_dim + action_dim, hidden)
    w2, b2 = linear(ks[2], ks[3], hidden, hidden)
    w3, b3 = linear(ks[4], ks[5], hidden, 1)

    bf = jnp.bfloat16
    return (w1[:, :state_dim].astype(bf), w1[:, state_dim:].astype(bf), b1,
            w2.astype(bf), b2, w3.astype(bf), b3)


def discriminator_reference(state, action, params):
    w1s, w1a, b1, w2, b2, w3, b3 = params
    w1 = jnp.concatenate([w1s, w1a], axis=1).astype(jnp.float32)   # (64, sd+ad)
    sa = jnp.concatenate([state, action], axis=1)
    h = jnp.tanh(sa @ w1.T + b1.T)
    h = jnp.tanh(h @ w2.astype(jnp.float32).T + b2.T)
    logits = h @ w3.astype(jnp.float32).T + b3.T
    return 1.0 / (1.0 + jnp.exp(-logits))


if __name__ == "__main__":
    key = jax.random.PRNGKey(0)
    k_param, k_data = jax.random.split(key)

    state_dim, action_dim = 16, 8
    params = init_discriminator_params(k_param, state_dim, action_dim)

    # batch=200: small ragged batch -> single (208-row) block, exercises padding.
    # batch=512: splits into two 256-row blocks -> multi-block / v7x two-core
    #            path with no padding copy.
    for batch in (200, 512):
        ks, ka = jax.random.split(jax.random.fold_in(k_data, batch))
        state = jax.random.normal(ks, (batch, state_dim), jnp.float32)
        action = jax.random.normal(ka, (batch, action_dim), jnp.float32)

        out = jax.block_until_ready(
            discriminator_forward(state, action, params, block_b=2048))
        ref = discriminator_reference(state, action, params)

        assert out.shape == (batch, 1), out.shape
        # bf16 matmul inputs (f32 accumulation) + approx reciprocal -> loosened
        # tolerance vs the f32 reference.
        assert jnp.allclose(out, ref, atol=1e-2, rtol=1e-2), \
            f"mismatch vs reference (batch={batch})"

    print("KERNEL_OK")
</pallas_src>

<mosaic_0001>
module attributes {stable_mosaic.version = 11 : i64} {
  func.func @_disc_kernel(%arg0: i32, %arg1: memref<200x16xf32, #tpu.memory_space<vmem>>, %arg2: memref<200x8xf32, #tpu.memory_space<vmem>>, %arg3: memref<64x16xbf16, #tpu.memory_space<vmem>>, %arg4: memref<64x8xbf16, #tpu.memory_space<vmem>>, %arg5: memref<64x1xf32, #tpu.memory_space<vmem>>, %arg6: memref<64x64xbf16, #tpu.memory_space<vmem>>, %arg7: memref<64x1xf32, #tpu.memory_space<vmem>>, %arg8: memref<1x64xbf16, #tpu.memory_space<vmem>>, %arg9: memref<1x1xf32, #tpu.memory_space<vmem>>, %arg10: memref<1x200xf32, #tpu.memory_space<vmem>>) attributes {dimension_semantics = [#tpu.dimension_semantics<parallel>], iteration_bounds = array<i64: 1>, scalar_prefetch = 0 : i64, scratch_operands = 0 : i64, tpu.core_type = #tpu.core_type<tc>, window_params = [{transform_indices = @transform_0, window_bounds = array<i64: 200, 16>}, {transform_indices = @transform_1, window_bounds = array<i64: 200, 8>}, {pipeline_mode = #tpu.pipeline_mode<synchronous>, transform_indices = @transform_2, window_bounds = array<i64: 64, 16>}, {pipeline_mode = #tpu.pipeline_mode<synchronous>, transform_indices = @transform_3, window_bounds = array<i64: 64, 8>}, {pipeline_mode = #tpu.pipeline_mode<synchronous>, transform_indices = @transform_4, window_bounds = array<i64: 64, 1>}, {pipeline_mode = #tpu.pipeline_mode<synchronous>, transform_indices = @transform_5, window_bounds = array<i64: 64, 64>}, {pipeline_mode = #tpu.pipeline_mode<synchronous>, transform_indices = @transform_6, window_bounds = array<i64: 64, 1>}, {pipeline_mode = #tpu.pipeline_mode<synchronous>, transform_indices = @transform_7, window_bounds = array<i64: 1, 64>}, {pipeline_mode = #tpu.pipeline_mode<synchronous>, transform_indices = @transform_8, window_bounds = array<i64: 1, 1>}, {transform_indices = @transform_9, window_bounds = array<i64: 1, 200>}]} {
    %c0 = arith.constant 0 : index
    %c0_0 = arith.constant 0 : index
    %0 = vector.load %arg1[%c0, %c0_0] : memref<200x16xf32, #tpu.memory_space<vmem>>, vector<200x16xf32>
    %1 = tpu.transpose %0, [1, 0] : vector<200x16xf32> -> vector<16x200xf32>
    %2 = arith.truncf %1 : vector<16x200xf32> to vector<16x200xbf16>
    %c0_1 = arith.constant 0 : index
    %c0_2 = arith.constant 0 : index
    %3 = vector.load %arg2[%c0_1, %c0_2] : memref<200x8xf32, #tpu.memory_space<vmem>>, vector<200x8xf32>
    %4 = tpu.transpose %3, [1, 0] : vector<200x8xf32> -> vector<8x200xf32>
    %5 = arith.truncf %4 : vector<8x200xf32> to vector<8x200xbf16>
    %c0_3 = arith.constant 0 : index
    %c0_4 = arith.constant 0 : index
    %6 = vector.load %arg3[%c0_3, %c0_4] : memref<64x16xbf16, #tpu.memory_space<vmem>>, vector<64x16xbf16>
    %cst = arith.constant dense<0.000000e+00> : vector<64x200xf32>
    %7 = tpu.matmul %6, %2, %cst {dimension_numbers = #tpu.dot_dimension_numbers<[1], [0], [0], [1], [0, 0, 1, 1], [], []>} : vector<64x16xbf16>, vector<16x200xbf16>, vector<64x200xf32> -> vector<64x200xf32>
    %c0_5 = arith.constant 0 : index
    %c0_6 = arith.constant 0 : index
    %8 = vector.load %arg4[%c0_5, %c0_6] : memref<64x8xbf16, #tpu.memory_space<vmem>>, vector<64x8xbf16>
    %cst_7 = arith.constant dense<0.000000e+00> : vector<64x200xf32>
    %9 = tpu.matmul %8, %5, %cst_7 {dimension_numbers = #tpu.dot_dimension_numbers<[1], [0], [0], [1], [0, 0, 1, 1], [], []>} : vector<64x8xbf16>, vector<8x200xbf16>, vector<64x200xf32> -> vector<64x200xf32>
    %10 = arith.addf %7, %9 : vector<64x200xf32>
    %c0_8 = arith.constant 0 : index
    %c0_9 = arith.constant 0 : index
    %11 = vector.load %arg5[%c0_8, %c0_9] : memref<64x1xf32, #tpu.memory_space<vmem>>, vector<64x1xf32>
    %12 = vector.broadcast %11 : vector<64x1xf32> to vector<64x200xf32>
    %13 = arith.addf %10, %12 : vector<64x200xf32>
    %14 = math.tanh %13 : vector<64x200xf32>
    %c0_10 = arith.constant 0 : index
    %c0_11 = arith.constant 0 : index
    %15 = vector.load %arg6[%c0_10, %c0_11] : memref<64x64xbf16, #tpu.memory_space<vmem>>, vector<64x64xbf16>
    %16 = arith.truncf %14 : vector<64x200xf32> to vector<64x200xbf16>
    %cst_12 = arith.constant dense<0.000000e+00> : vector<64x200xf32>
    %17 = tpu.matmul %15, %16, %cst_12 {dimension_numbers = #tpu.dot_dimension_numbers<[1], [0], [0], [1], [0, 0, 1, 1], [], []>} : vector<64x64xbf16>, vector<64x200xbf16>, vector<64x200xf32> -> vector<64x200xf32>
    %c0_13 = arith.constant 0 : index
    %c0_14 = arith.constant 0 : index
    %18 = vector.load %arg7[%c0_13, %c0_14] : memref<64x1xf32, #tpu.memory_space<vmem>>, vector<64x1xf32>
    %19 = vector.broadcast %18 : vector<64x1xf32> to vector<64x200xf32>
    %20 = arith.addf %17, %19 : vector<64x200xf32>
    %21 = math.tanh %20 : vector<64x200xf32>
    %c0_15 = arith.constant 0 : index
    %c0_16 = arith.constant 0 : index
    %22 = vector.load %arg8[%c0_15, %c0_16] : memref<1x64xbf16, #tpu.memory_space<vmem>>, vector<1x64xbf16>
    %23 = arith.truncf %21 : vector<64x200xf32> to vector<64x200xbf16>
    %cst_17 = arith.constant dense<0.000000e+00> : vector<1x200xf32>
    %24 = tpu.matmul %22, %23, %cst_17 {dimension_numbers = #tpu.dot_dimension_numbers<[1], [0], [0], [1], [0, 0, 1, 1], [], []>} : vector<1x64xbf16>, vector<64x200xbf16>, vector<1x200xf32> -> vector<1x200xf32>
    %c0_18 = arith.constant 0 : index
    %c0_19 = arith.constant 0 : index
    %25 = vector.load %arg9[%c0_18, %c0_19] : memref<1x1xf32, #tpu.memory_space<vmem>>, vector<1x1xf32>
    %26 = vector.broadcast %25 : vector<1x1xf32> to vector<1x200xf32>
    %27 = arith.addf %24, %26 : vector<1x200xf32>
    %cst_20 = arith.constant 0.000000e+00 : f32
    %28 = vector.broadcast %cst_20 : f32 to vector<1x200xf32>
    %29 = arith.subf %28, %27 : vector<1x200xf32>
    %30 = math.exp %29 : vector<1x200xf32>
    %cst_21 = arith.constant 1.000000e+00 : f32
    %31 = vector.broadcast %cst_21 : f32 to vector<1x200xf32>
    %32 = arith.addf %31, %30 : vector<1x200xf32>
    %33 = tpu.reciprocal %32 {approx = true} : vector<1x200xf32> -> vector<1x200xf32>
    %c0_22 = arith.constant 0 : index
    %c0_23 = arith.constant 0 : index
    %34 = vector.load %arg10[%c0_22, %c0_23] : memref<1x200xf32, #tpu.memory_space<vmem>>, vector<1x200xf32>
    tpu.vector_store %arg10[%c0_22, %c0_23], %33 {strides = array<i32>} : memref<1x200xf32, #tpu.memory_space<vmem>>, vector<1x200xf32>,
    return
  }
  func.func @transform_0(%arg0: i32) -> (i32, i32) {
    %c0_i32 = arith.constant 0 : i32
    %c0_i32_0 = arith.constant 0 : i32
    return %arg0, %c0_i32 : i32, i32
  }
  func.func @transform_1(%arg0: i32) -> (i32, i32) {
    %c0_i32 = arith.constant 0 : i32
    %c0_i32_0 = arith.constant 0 : i32
    return %arg0, %c0_i32 : i32, i32
  }
  func.func @transform_2(%arg0: i32) -> (i32, i32) {
    %c0_i32 = arith.constant 0 : i32
    %c0_i32_0 = arith.constant 0 : i32
    %c0_i32_1 = arith.constant 0 : i32
    return %c0_i32, %c0_i32_0 : i32, i32
  }
  func.func @transform_3(%arg0: i32) -> (i32, i32) {
    %c0_i32 = arith.constant 0 : i32
    %c0_i32_0 = arith.constant 0 : i32
    %c0_i32_1 = arith.constant 0 : i32
    return %c0_i32, %c0_i32_0 : i32, i32
  }
  func.func @transform_4(%arg0: i32) -> (i32, i32) {
    %c0_i32 = arith.constant 0 : i32
    %c0_i32_0 = arith.constant 0 : i32
    %c0_i32_1 = arith.constant 0 : i32
    return %c0_i32, %c0_i32_0 : i32, i32
  }
  func.func @transform_5(%arg0: i32) -> (i32, i32) {
    %c0_i32 = arith.constant 0 : i32
    %c0_i32_0 = arith.constant 0 : i32
    %c0_i32_1 = arith.constant 0 : i32
    return %c0_i32, %c0_i32_0 : i32, i32
  }
  func.func @transform_6(%arg0: i32) -> (i32, i32) {
    %c0_i32 = arith.constant 0 : i32
    %c0_i32_0 = arith.constant 0 : i32
    %c0_i32_1 = arith.constant 0 : i32
    return %c0_i32, %c0_i32_0 : i32, i32
  }
  func.func @transform_7(%arg0: i32) -> (i32, i32) {
    %c0_i32 = arith.constant 0 : i32
    %c0_i32_0 = arith.constant 0 : i32
    %c0_i32_1 = arith.constant 0 : i32
    return %c0_i32, %c0_i32_0 : i32, i32
  }
  func.func @transform_8(%arg0: i32) -> (i32, i32) {
    %c0_i32 = arith.constant 0 : i32
    %c0_i32_0 = arith.constant 0 : i32
    %c0_i32_1 = arith.constant 0 : i32
    return %c0_i32, %c0_i32_0 : i32, i32
  }
  func.func @transform_9(%arg0: i32) -> (i32, i32) {
    %c0_i32 = arith.constant 0 : i32
    %c0_i32_0 = arith.constant 0 : i32
    return %c0_i32, %arg0 : i32, i32
  }
}

</mosaic_0001>

<llo_original>
// kernel: tpu_custom_call.1
$region0: #{tpu_custom_call.1}
  #allocation0 [shape = 'u32[]', space=smem, size = 0x4, offset = 0x4, fixed_abs, tag = 'smem constant byte address 0x4 - core index']
  #allocation1 [shape = 'u32[72,128]{1,0:T(1,128)}', space=vmem, size = 0x9000, scoped, tag = 'internal scratch']
  #allocation2 [shape = 'f32[1,1]{1,0:T(1,128)S(1)}', space=vmem, size = 0x200, scoped, tag = 'scoped memory for tpu_custom_call.1']
  %s0 = inlined_call_operand.vmem [shape: f32[200,16], index: 0, kind: input, shape index: {}]
  %s1 = inlined_call_operand.vmem [shape: f32[200,8], index: 1, kind: input, shape index: {}]
  %s2 = inlined_call_operand.vmem [shape: bf16[64,16], index: 2, kind: input, shape index: {}]
  %s3 = inlined_call_operand.vmem [shape: bf16[64,8], index: 3, kind: input, shape index: {}]
  %s4 = inlined_call_operand.vmem [shape: f32[64,1], index: 4, kind: input, shape index: {}]
  %s5 = inlined_call_operand.vmem [shape: bf16[64,64], index: 5, kind: input, shape index: {}]
  %s6 = inlined_call_operand.vmem [shape: f32[64,1], index: 6, kind: input, shape index: {}]
  %s7 = inlined_call_operand.vmem [shape: bf16[1,64], index: 7, kind: input, shape index: {}]
  %s8 = inlined_call_operand.<no memory space> [shape: f32[1,1], index: 8, kind: input, shape index: {}]
  %s9 = inlined_call_operand.hbm [shape: f32[1,200], index: 9, kind: output, shape index: {}]
  %s10 = sld [smem:[#allocation0]]
  $region46: #{tpu_custom_call.1} parent=0
    _
  %s12 = ssub.s32 1, %s10
  %s13 = scalar_select 0, %s12, %s10
  %v14 = vstv %s8
  %15 = vst [vmem:[#allocation2] sm:$0x1] %v14
  $region1: #{tpu_custom_call.1} parent=0
    #allocation3 [shape = 'u8[1024]{0}', space=vmem, size = 0x400, scoped, tag = 'output window, operand 0, single buffered']
    #allocation4 [shape = 's32[1]{0}', space=sflag, size = 0x4, scoped, tag = 'scoped memory for tpu_custom_call.1']
    %16 = vsyncpa [#allocation4], 0
    // Predicated region
    $region2: #{tpu_custom_call.1} parent=1 // pred_check
      _
    $region3: #{tpu_custom_call.1} parent=1 // pred_check_branch
      %18 = sbr.rel (0) target = $region5
    $region4: #{tpu_custom_call.1} parent=1 // pred_region
      _
    $region5: #{tpu_custom_call.1} parent=1 // pred_fallthru
      _
    // Predicated region
    $region6: #{tpu_custom_call.1} parent=1 // pred_check
      _
    $region7: #{tpu_custom_call.1} parent=1 // pred_check_branch
      %20 = sbr.rel (0) target = $region9
    $region8: #{tpu_custom_call.1} parent=1 // pred_region
      _
    $region9: #{tpu_custom_call.1} parent=1 // pred_fallthru
      _
    // Predicated region
    $region10: #{tpu_custom_call.1} parent=1 // pred_check
      _
    $region11: #{tpu_custom_call.1} parent=1 // pred_check_branch
      %22 = sbr.rel (0) target = $region13
    $region12: #{tpu_custom_call.1} parent=1 // pred_region
      _
    $region13: #{tpu_custom_call.1} parent=1 // pred_fallthru
      _
    // Predicated region
    $region14: #{tpu_custom_call.1} parent=1 // pred_check
      _
    $region15: #{tpu_custom_call.1} parent=1 // pred_check_branch
      %24 = sbr.rel (0) target = $region17
    $region16: #{tpu_custom_call.1} parent=1 // pred_region
      _
    $region17: #{tpu_custom_call.1} parent=1 // pred_fallthru
      _
    // Predicated region
    $region18: #{tpu_custom_call.1} parent=1 // pred_check
      _
    $region19: #{tpu_custom_call.1} parent=1 // pred_check_branch
      %26 = sbr.rel (0) target = $region21
    $region20: #{tpu_custom_call.1} parent=1 // pred_region
      _
    $region21: #{tpu_custom_call.1} parent=1 // pred_fallthru
      _
    // Predicated region
    $region22: #{tpu_custom_call.1} parent=1 // pred_check
      _
    $region23: #{tpu_custom_call.1} parent=1 // pred_check_branch
      %28 = sbr.rel (0) target = $region25
    $region24: #{tpu_custom_call.1} parent=1 // pred_region
      _
    $region25: #{tpu_custom_call.1} parent=1 // pred_fallthru
      _
    // Predicated region
    $region26: #{tpu_custom_call.1} parent=1 // pred_check
      _
    $region27: #{tpu_custom_call.1} parent=1 // pred_check_branch
      %30 = sbr.rel (0) target = $region29
    $region28: #{tpu_custom_call.1} parent=1 // pred_region
      _
    $region29: #{tpu_custom_call.1} parent=1 // pred_fallthru
      _
    // Predicated region
    $region30: #{tpu_custom_call.1} parent=1 // pred_check
      _
    $region31: #{tpu_custom_call.1} parent=1 // pred_check_branch
      %32 = sbr.rel (0) target = $region33
    $region32: #{tpu_custom_call.1} parent=1 // pred_region
      _
    $region33: #{tpu_custom_call.1} parent=1 // pred_fallthru
      _
    // Predicated region
    $region34: #{tpu_custom_call.1} parent=1 // pred_check
      _
    $region35: #{tpu_custom_call.1} parent=1 // pred_check_branch
      %34 = sbr.rel (0) target = $region37
    $region36: #{tpu_custom_call.1} parent=1 // pred_region
      _
    $region37: #{tpu_custom_call.1} parent=1 // pred_fallthru
      _
    %v36 = vld [vmem:[%s0] sm:$0xff]
    %v37 = vld [vmem:[%s0 + $0x8] sm:$0xff]
    %v38 = vld [vmem:[%s0 + $0x10] sm:$0xff]
    %v39 = vld [vmem:[%s0 + $0x18] sm:$0xff]
    %v40 = vld [vmem:[%s0 + $0x20] sm:$0xff]
    %v41 = vld [vmem:[%s0 + $0x28] sm:$0xff]
    %v42 = vld [vmem:[%s0 + $0x30] sm:$0xff]
    %v43 = vld [vmem:[%s0 + $0x38] sm:$0xff]
    %v44 = vld [vmem:[%s0 + $0x40] sm:$0xff]
    %v45 = vld [vmem:[%s0 + $0x48] sm:$0xff]
    %v46 = vld [vmem:[%s0 + $0x50] sm:$0xff]
    %v47 = vld [vmem:[%s0 + $0x58] sm:$0xff]
    %v48 = vld [vmem:[%s0 + $0x60] sm:$0xff]
    %v49 = vld [vmem:[%s0 + $0x68] sm:$0xff]
    %v50 = vld [vmem:[%s0 + $0x70] sm:$0xff]
    %v51 = vld [vmem:[%s0 + $0x78] sm:$0xff]
    %v52 = vld [vmem:[%s0 + $0x80] sm:$0xff]
    %v53 = vld [vmem:[%s0 + $0x88] sm:$0xff]
    %v54 = vld [vmem:[%s0 + $0x90] sm:$0xff]
    %v55 = vld [vmem:[%s0 + $0x98] sm:$0xff]
    %v56 = vld [vmem:[%s0 + $0xa0] sm:$0xff]
    %v57 = vld [vmem:[%s0 + $0xa8] sm:$0xff]
    %v58 = vld [vmem:[%s0 + $0xb0] sm:$0xff]
    %v59 = vld [vmem:[%s0 + $0xb8] sm:$0xff]
    %v60 = vld [vmem:[%s0 + $0xc0] sm:$0xff]
    %61 = vxpose.xlu0.b32.start [1/16] %v36, 128
    %62 = vxpose.xlu0.b32.cont [2/16] %v37, 128
    %63 = vxpose.xlu0.b32.cont [3/16] %v38, 128
    %64 = vxpose.xlu0.b32.cont [4/16] %v39, 128
    %65 = vxpose.xlu0.b32.cont [5/16] %v40, 128
    %66 = vxpose.xlu0.b32.cont [6/16] %v41, 128
    %67 = vxpose.xlu0.b32.cont [7/16] %v42, 128
    %68 = vxpose.xlu0.b32.cont [8/16] %v43, 128
    %69 = vxpose.xlu0.b32.cont [9/16] %v44, 128
    %70 = vxpose.xlu0.b32.cont [10/16] %v45, 128
    %71 = vxpose.xlu0.b32.cont [11/16] %v46, 128
    %72 = vxpose.xlu0.b32.cont [12/16] %v47, 128
    %73 = vxpose.xlu0.b32.cont [13/16] %v48, 128
    %74 = vxpose.xlu0.b32.cont [14/16] %v49, 128
    %75 = vxpose.xlu0.b32.cont [15/16] %v50, 128
    %76 = vxpose.xlu0.b32.end [16/16] %v51, 128
    %v77 = vpop.trf.xlu0
    %v78 = vpop.trf.xlu0
    %v79 = vpop.trf.xlu0
    %v80 = vpop.trf.xlu0
    %v81 = vpop.trf.xlu0
    %v82 = vpop.trf.xlu0
    %v83 = vpop.trf.xlu0
    %v84 = vpop.trf.xlu0
    %v85 = vpop.trf.xlu0
    %v86 = vpop.trf.xlu0
    %v87 = vpop.trf.xlu0
    %v88 = vpop.trf.xlu0
    %v89 = vpop.trf.xlu0
    %v90 = vpop.trf.xlu0
    %v91 = vpop.trf.xlu0
    %v92 = vpop.trf.xlu0
    %93 = vxpose.xlu0.b32.start [1/16] %v52, 128
    %94 = vxpose.xlu0.b32.cont [2/16] %v53, 128
    %95 = vxpose.xlu0.b32.cont [3/16] %v54, 128
    %96 = vxpose.xlu0.b32.cont [4/16] %v55, 128
    %97 = vxpose.xlu0.b32.cont [5/16] %v56, 128
    %98 = vxpose.xlu0.b32.cont [6/16] %v57, 128
    %99 = vxpose.xlu0.b32.cont [7/16] %v58, 128
    %100 = vxpose.xlu0.b32.cont [8/16] %v59, 128
    %101 = vxpose.xlu0.b32.cont [9/16] %v60, 128
    %102 = vxpose.xlu0.b32.cont [10/16] 0.0, 128
    %103 = vxpose.xlu0.b32.cont [11/16] 0.0, 128
    %104 = vxpose.xlu0.b32.cont [12/16] 0.0, 128
    %105 = vxpose.xlu0.b32.cont [13/16] 0.0, 128
    %106 = vxpose.xlu0.b32.cont [14/16] 0.0, 128
    %107 = vxpose.xlu0.b32.cont [15/16] 0.0, 128
    %108 = vxpose.xlu0.b32.end [16/16] 0.0, 128
    %v109 = vpop.trf.xlu0
    %v110 = vpop.trf.xlu0
    %v111 = vpop.trf.xlu0
    %v112 = vpop.trf.xlu0
    %v113 = vpop.trf.xlu0
    %v114 = vpop.trf.xlu0
    %v115 = vpop.trf.xlu0
    %v116 = vpop.trf.xlu0
    %v117 = vpop.trf.xlu0
    %v118 = vpop.trf.xlu0
    %v119 = vpop.trf.xlu0
    %v120 = vpop.trf.xlu0
    %v121 = vpop.trf.xlu0
    %v122 = vpop.trf.xlu0
    %v123 = vpop.trf.xlu0
    %v124 = vpop.trf.xlu0
    %v125 = vpack.c.bf16 %v78, %v77
    %v126 = vpack.c.bf16 %v110, %v109
    %v127 = vld [vmem:[%s1] sm:$0xff]
    %v128 = vld [vmem:[%s1 + $0x8] sm:$0xff]
    %v129 = vld [vmem:[%s1 + $0x10] sm:$0xff]
    %v130 = vld [vmem:[%s1 + $0x18] sm:$0xff]
    %v131 = vld [vmem:[%s1 + $0x20] sm:$0xff]
    %v132 = vld [vmem:[%s1 + $0x28] sm:$0xff]
    %v133 = vld [vmem:[%s1 + $0x30] sm:$0xff]
    %v134 = vld [vmem:[%s1 + $0x38] sm:$0xff]
    %v135 = vld [vmem:[%s1 + $0x40] sm:$0xff]
    %v136 = vld [vmem:[%s1 + $0x48] sm:$0xff]
    %v137 = vld [vmem:[%s1 + $0x50] sm:$0xff]
    %v138 = vld [vmem:[%s1 + $0x58] sm:$0xff]
    %v139 = vld [vmem:[%s1 + $0x60] sm:$0xff]
    %v140 = vld [vmem:[%s1 + $0x68] sm:$0xff]
    %v141 = vld [vmem:[%s1 + $0x70] sm:$0xff]
    %v142 = vld [vmem:[%s1 + $0x78] sm:$0xff]
    %v143 = vld [vmem:[%s1 + $0x80] sm:$0xff]
    %v144 = vld [vmem:[%s1 + $0x88] sm:$0xff]
    %v145 = vld [vmem:[%s1 + $0x90] sm:$0xff]
    %v146 = vld [vmem:[%s1 + $0x98] sm:$0xff]
    %v147 = vld [vmem:[%s1 + $0xa0] sm:$0xff]
    %v148 = vld [vmem:[%s1 + $0xa8] sm:$0xff]
    %v149 = vld [vmem:[%s1 + $0xb0] sm:$0xff]
    %v150 = vld [vmem:[%s1 + $0xb8] sm:$0xff]
    %v151 = vld [vmem:[%s1 + $0xc0] sm:$0xff]
    %152 = vxpose.xlu0.b32.start [1/16] %v127, 128
    %153 = vxpose.xlu0.b32.cont [2/16] %v128, 128
    %154 = vxpose.xlu0.b32.cont [3/16] %v129, 128
    %155 = vxpose.xlu0.b32.cont [4/16] %v130, 128
    %156 = vxpose.xlu0.b32.cont [5/16] %v131, 128
    %157 = vxpose.xlu0.b32.cont [6/16] %v132, 128
    %158 = vxpose.xlu0.b32.cont [7/16] %v133, 128
    %159 = vxpose.xlu0.b32.cont [8/16] %v134, 128
    %160 = vxpose.xlu0.b32.cont [9/16] %v135, 128
    %161 = vxpose.xlu0.b32.cont [10/16] %v136, 128
    %162 = vxpose.xlu0.b32.cont [11/16] %v137, 128
    %163 = vxpose.xlu0.b32.cont [12/16] %v138, 128
    %164 = vxpose.xlu0.b32.cont [13/16] %v139, 128
    %165 = vxpose.xlu0.b32.cont [14/16] %v140, 128
    %166 = vxpose.xlu0.b32.cont [15/16] %v141, 128
    %167 = vxpose.xlu0.b32.end [16/16] %v142, 128
    %v168 = vpop.trf.xlu0
    %v169 = vpop.trf.xlu0
    %v170 = vpop.trf.xlu0
    %v171 = vpop.trf.xlu0
    %v172 = vpop.trf.xlu0
    %v173 = vpop.trf.xlu0
    %v174 = vpop.trf.xlu0
    %v175 = vpop.trf.xlu0
    %v176 = vpop.trf.xlu0
    %v177 = vpop.trf.xlu0
    %v178 = vpop.trf.xlu0
    %v179 = vpop.trf.xlu0
    %v180 = vpop.trf.xlu0
    %v181 = vpop.trf.xlu0
    %v182 = vpop.trf.xlu0
    %v183 = vpop.trf.xlu0
    %184 = vxpose.xlu0.b32.start [1/16] %v143, 128
    %185 = vxpose.xlu0.b32.cont [2/16] %v144, 128
    %186 = vxpose.xlu0.b32.cont [3/16] %v145, 128
    %187 = vxpose.xlu0.b32.cont [4/16] %v146, 128
    %188 = vxpose.xlu0.b32.cont [5/16] %v147, 128
    %189 = vxpose.xlu0.b32.cont [6/16] %v148, 128
    %190 = vxpose.xlu0.b32.cont [7/16] %v149, 128
    %191 = vxpose.xlu0.b32.cont [8/16] %v150, 128
    %192 = vxpose.xlu0.b32.cont [9/16] %v151, 128
    %193 = vxpose.xlu0.b32.cont [10/16] 0.0, 128
    %194 = vxpose.xlu0.b32.cont [11/16] 0.0, 128
    %195 = vxpose.xlu0.b32.cont [12/16] 0.0, 128
    %196 = vxpose.xlu0.b32.cont [13/16] 0.0, 128
    %197 = vxpose.xlu0.b32.cont [14/16] 0.0, 128
    %198 = vxpose.xlu0.b32.cont [15/16] 0.0, 128
    %199 = vxpose.xlu0.b32.end [16/16] 0.0, 128
    %v200 = vpop.trf.xlu0
    %v201 = vpop.trf.xlu0
    %v202 = vpop.trf.xlu0
    %v203 = vpop.trf.xlu0
    %v204 = vpop.trf.xlu0
    %v205 = vpop.trf.xlu0
    %v206 = vpop.trf.xlu0
    %v207 = vpop.trf.xlu0
    %v208 = vpop.trf.xlu0
    %v209 = vpop.trf.xlu0
    %v210 = vpop.trf.xlu0
    %v211 = vpop.trf.xlu0
    %v212 = vpop.trf.xlu0
    %v213 = vpop.trf.xlu0
    %v214 = vpop.trf.xlu0
    %v215 = vpop.trf.xlu0
    %v216 = vpack.c.bf16 %v168, %v168
    %v217 = vpack.c.bf16 %v200, %v200
    %v218 = vld [vmem:[%s2] sm:$0xf]
    %v219 = vld [vmem:[%s2 + $0x4] sm:$0xf]
    %v220 = vld [vmem:[%s2 + $0x8] sm:$0xf]
    %v221 = vld [vmem:[%s2 + $0xc] sm:$0xf]
    %v222 = vld [vmem:[%s2 + $0x10] sm:$0xf]
    %v223 = vld [vmem:[%s2 + $0x14] sm:$0xf]
    %v224 = vld [vmem:[%s2 + $0x18] sm:$0xf]
    %v225 = vld [vmem:[%s2 + $0x1c] sm:$0xf]
    %v226 = vld [vmem:[%s3] sm:$0xf]
    %v227 = vld [vmem:[%s3 + $0x4] sm:$0xf]
    %v228 = vld [vmem:[%s3 + $0x8] sm:$0xf]
    %v229 = vld [vmem:[%s3 + $0xc] sm:$0xf]
    %v230 = vld [vmem:[%s3 + $0x10] sm:$0xf]
    %v231 = vld [vmem:[%s3 + $0x14] sm:$0xf]
    %v232 = vld [vmem:[%s3 + $0x18] sm:$0xf]
    %v233 = vld [vmem:[%s3 + $0x1c] sm:$0xf]
    %v242 = vunpack.c.l.b16 %v226
    %v243 = vunpack.c.l.b16 %v227
    %v244 = vunpack.c.l.b16 %v228
    %v245 = vunpack.c.l.b16 %v229
    %v246 = vunpack.c.l.b16 %v230
    %v247 = vunpack.c.l.b16 %v231
    %v248 = vunpack.c.l.b16 %v232
    %v249 = vunpack.c.l.b16 %v233
    %v250 = vpack.c.b16 %v243, %v242
    %v251 = vpack.c.b16 %v245, %v244
    %v252 = vpack.c.b16 %v247, %v246
    %v253 = vpack.c.b16 %v249, %v248
    %vm254 = vcmask 64512
    %v256 = vsel %vm254, %v250, 0
    %v259 = vsel %vm254, %v251, 0
    %v262 = vsel %vm254, %v252, 0
    %v265 = vsel %vm254, %v253, 0
    %vm267 = vcmask 1043456
    %v269 = vsel %vm267, %v216, 0
    %v272 = vsel %vm267, %v217, 0
    %274 = vmatpush.bf16.msra.mxu0 0
    %275 = vmatpush.bf16.msra.mxu0 0
    %276 = vmatpush.bf16.msra.mxu0 0
    %277 = vmatpush.bf16.msra.mxu0 0
    %278 = vmatpush.bf16.msra.mxu0 0
    %279 = vmatpush.bf16.msra.mxu0 0
    %280 = vmatpush.bf16.msra.mxu0 0
    %281 = vmatpush.bf16.msra.mxu0 %v269
    %282 = vmatmul.bf16.gmra.mxu0 %v256
    %v283 = vpop.f32.mrf.mxu0
    %v284 = vadd.f32 0.0, %v283
    %v285 = vpop.f32.mrf.mxu0
    %v286 = vadd.f32 0.0, %v285
    %287 = vmatmul.bf16.gmra.mxu0 %v259
    %v288 = vpop.f32.mrf.mxu0
    %v289 = vadd.f32 0.0, %v288
    %v290 = vpop.f32.mrf.mxu0
    %v291 = vadd.f32 0.0, %v290
    %292 = vmatmul.bf16.gmra.mxu0 %v262
    %v293 = vpop.f32.mrf.mxu0
    %v294 = vadd.f32 0.0, %v293
    %v295 = vpop.f32.mrf.mxu0
    %v296 = vadd.f32 0.0, %v295
    %297 = vmatmul.bf16.gmra.mxu0 %v265
    %v298 = vpop.f32.mrf.mxu0
    %v299 = vadd.f32 0.0, %v298
    %v300 = vpop.f32.mrf.mxu0
    %v301 = vadd.f32 0.0, %v300
    %302 = vdwg.mxu0
    %303 = vmatpush.bf16.msra.mxu0 0
    %304 = vmatpush.bf16.msra.mxu0 0
    %305 = vmatpush.bf16.msra.mxu0 0
    %306 = vmatpush.bf16.msra.mxu0 0
    %307 = vmatpush.bf16.msra.mxu0 0
    %308 = vmatpush.bf16.msra.mxu0 0
    %309 = vmatpush.bf16.msra.mxu0 0
    %310 = vmatpush.bf16.msra.mxu0 %v272
    %311 = vmatmul.bf16.gmra.mxu0 %v256
    %v312 = vpop.f32.mrf.mxu0
    %v313 = vadd.f32 0.0, %v312
    %v314 = vpop.f32.mrf.mxu0
    %v315 = vadd.f32 0.0, %v314
    %316 = vmatmul.bf16.gmra.mxu0 %v259
    %v317 = vpop.f32.mrf.mxu0
    %v318 = vadd.f32 0.0, %v317
    %v319 = vpop.f32.mrf.mxu0
    %v320 = vadd.f32 0.0, %v319
    %321 = vmatmul.bf16.gmra.mxu0 %v262
    %v322 = vpop.f32.mrf.mxu0
    %v323 = vadd.f32 0.0, %v322
    %v324 = vpop.f32.mrf.mxu0
    %v325 = vadd.f32 0.0, %v324
    %326 = vmatmul.bf16.gmra.mxu0 %v265
    %v327 = vpop.f32.mrf.mxu0
    %v328 = vadd.f32 0.0, %v327
    %v329 = vpop.f32.mrf.mxu0
    %v330 = vadd.f32 0.0, %v329
    %331 = vdwg.mxu0
    %v340 = vunpack.c.l.b16 %v218
    %v341 = vunpack.c.l.b16 %v219
    %v342 = vunpack.c.l.b16 %v220
    %v343 = vunpack.c.l.b16 %v221
    %v344 = vunpack.c.l.b16 %v222
    %v345 = vunpack.c.l.b16 %v223
    %v346 = vunpack.c.l.b16 %v224
    %v347 = vunpack.c.l.b16 %v225
    %v348 = vpack.c.b16 %v341, %v340
    %v349 = vpack.c.b16 %v343, %v342
    %v350 = vpack.c.b16 %v345, %v344
    %v351 = vpack.c.b16 %v347, %v346
    %vm352 = vcmask 130048
    %v354 = vsel %vm352, %v348, 0
    %v357 = vsel %vm352, %v349, 0
    %v360 = vsel %vm352, %v350, 0
    %v363 = vsel %vm352, %v351, 0
    %365 = vmatpush.bf16.msra.mxu0 0
    %366 = vmatpush.bf16.msra.mxu0 0
    %367 = vmatpush.bf16.msra.mxu0 0
    %368 = vmatpush.bf16.msra.mxu0 0
    %369 = vmatpush.bf16.msra.mxu0 0
    %370 = vmatpush.bf16.msra.mxu0 0
    %371 = vmatpush.bf16.msra.mxu0 0
    %372 = vmatpush.bf16.msra.mxu0 %v125
    %373 = vmatmul.bf16.gmra.mxu0 %v354
    %v374 = vpop.f32.mrf.mxu0
    %v375 = vadd.f32 %v284, %v374
    %v376 = vpop.f32.mrf.mxu0
    %v377 = vadd.f32 %v286, %v376
    %378 = vmatmul.bf16.gmra.mxu0 %v357
    %v379 = vpop.f32.mrf.mxu0
    %v380 = vadd.f32 %v289, %v379
    %v381 = vpop.f32.mrf.mxu0
    %v382 = vadd.f32 %v291, %v381
    %383 = vmatmul.bf16.gmra.mxu0 %v360
    %v384 = vpop.f32.mrf.mxu0
    %v385 = vadd.f32 %v294, %v384
    %v386 = vpop.f32.mrf.mxu0
    %v387 = vadd.f32 %v296, %v386
    %388 = vmatmul.bf16.gmra.mxu0 %v363
    %v389 = vpop.f32.mrf.mxu0
    %v390 = vadd.f32 %v299, %v389
    %v391 = vpop.f32.mrf.mxu0
    %v392 = vadd.f32 %v301, %v391
    %393 = vdwg.mxu0
    %394 = vmatpush.bf16.msra.mxu0 0
    %395 = vmatpush.bf16.msra.mxu0 0
    %396 = vmatpush.bf16.msra.mxu0 0
    %397 = vmatpush.bf16.msra.mxu0 0
    %398 = vmatpush.bf16.msra.mxu0 0
    %399 = vmatpush.bf16.msra.mxu0 0
    %400 = vmatpush.bf16.msra.mxu0 0
    %401 = vmatpush.bf16.msra.mxu0 %v126
    %402 = vmatmul.bf16.gmra.mxu0 %v354
    %v403 = vpop.f32.mrf.mxu0
    %v404 = vadd.f32 %v313, %v403
    %v405 = vpop.f32.mrf.mxu0
    %v406 = vadd.f32 %v315, %v405
    %407 = vmatmul.bf16.gmra.mxu0 %v357
    %v408 = vpop.f32.mrf.mxu0
    %v409 = vadd.f32 %v318, %v408
    %v410 = vpop.f32.mrf.mxu0
    %v411 = vadd.f32 %v320, %v410
    %412 = vmatmul.bf16.gmra.mxu0 %v360
    %v413 = vpop.f32.mrf.mxu0
    %v414 = vadd.f32 %v323, %v413
    %v415 = vpop.f32.mrf.mxu0
    %v416 = vadd.f32 %v325, %v415
    %417 = vmatmul.bf16.gmra.mxu0 %v363
    %v418 = vpop.f32.mrf.mxu0
    %v419 = vadd.f32 %v328, %v418
    %v420 = vpop.f32.mrf.mxu0
    %v421 = vadd.f32 %v330, %v420
    %422 = vdwg.mxu0
    %v423 = vld [vmem:[%s4] sm:$0xff]
    %v424 = vld [vmem:[%s4 + $0x8] sm:$0xff]
    %v425 = vld [vmem:[%s4 + $0x10] sm:$0xff]
    %v426 = vld [vmem:[%s4 + $0x18] sm:$0xff]
    %v427 = vld [vmem:[%s4 + $0x20] sm:$0xff]
    %v428 = vld [vmem:[%s4 + $0x28] sm:$0xff]
    %v429 = vld [vmem:[%s4 + $0x30] sm:$0xff]
    %v430 = vld [vmem:[%s4 + $0x38] sm:$0xff]
    %432 = vset.pattern.permute.xlu0 0
    %433 = vperm.xlu0 %432, %v423
    %v434 = vpop.permute.xlu0 %433
    %437 = vset.pattern.permute.xlu0 0
    %438 = vperm.xlu0 %437, %v424
    %v439 = vpop.permute.xlu0 %438
    %442 = vset.pattern.permute.xlu0 0
    %443 = vperm.xlu0 %442, %v425
    %v444 = vpop.permute.xlu0 %443
    %447 = vset.pattern.permute.xlu0 0
    %448 = vperm.xlu0 %447, %v426
    %v449 = vpop.permute.xlu0 %448
    %452 = vset.pattern.permute.xlu0 0
    %453 = vperm.xlu0 %452, %v427
    %v454 = vpop.permute.xlu0 %453
    %457 = vset.pattern.permute.xlu0 0
    %458 = vperm.xlu0 %457, %v428
    %v459 = vpop.permute.xlu0 %458
    %462 = vset.pattern.permute.xlu0 0
    %463 = vperm.xlu0 %462, %v429
    %v464 = vpop.permute.xlu0 %463
    %467 = vset.pattern.permute.xlu0 0
    %468 = vperm.xlu0 %467, %v430
    %v469 = vpop.permute.xlu0 %468
    %v471 = vadd.f32 %v375, %v434
    %v472 = vadd.f32 %v404, %v434
    %v473 = vadd.f32 %v377, %v439
    %v474 = vadd.f32 %v406, %v439
    %v475 = vadd.f32 %v380, %v444
    %v476 = vadd.f32 %v409, %v444
    %v477 = vadd.f32 %v382, %v449
    %v478 = vadd.f32 %v411, %v449
    %v479 = vadd.f32 %v385, %v454
    %v480 = vadd.f32 %v414, %v454
    %v481 = vadd.f32 %v387, %v459
    %v482 = vadd.f32 %v416, %v459
    %v483 = vadd.f32 %v390, %v464
    %v484 = vadd.f32 %v419, %v464
    %v485 = vadd.f32 %v392, %v469
    %v486 = vadd.f32 %v421, %v469
    %v487 = vtanh.pop %v471
    %v488 = vtanh.pop %v472
    %v489 = vtanh.pop %v473
    %v490 = vtanh.pop %v474
    %v491 = vtanh.pop %v475
    %v492 = vtanh.pop %v476
    %v493 = vtanh.pop %v477
    %v494 = vtanh.pop %v478
    %v495 = vtanh.pop %v479
    %v496 = vtanh.pop %v480
    %v497 = vtanh.pop %v481
    %v498 = vtanh.pop %v482
    %v499 = vtanh.pop %v483
    %v500 = vtanh.pop %v484
    %v501 = vtanh.pop %v485
    %v502 = vtanh.pop %v486
    %v503 = vld [vmem:[%s5] sm:$0xf]
    %v504 = vld [vmem:[%s5 + $0x4] sm:$0xf]
    %v505 = vld [vmem:[%s5 + $0x8] sm:$0xf]
    %v506 = vld [vmem:[%s5 + $0xc] sm:$0xf]
    %v507 = vld [vmem:[%s5 + $0x10] sm:$0xf]
    %v508 = vld [vmem:[%s5 + $0x14] sm:$0xf]
    %v509 = vld [vmem:[%s5 + $0x18] sm:$0xf]
    %v510 = vld [vmem:[%s5 + $0x1c] sm:$0xf]
    %v511 = vpack.c.bf16 %v489, %v487
    %v512 = vpack.c.bf16 %v490, %v488
    %v513 = vpack.c.bf16 %v493, %v491
    %v514 = vpack.c.bf16 %v494, %v492
    %v515 = vpack.c.bf16 %v497, %v495
    %v516 = vpack.c.bf16 %v498, %v496
    %v517 = vpack.c.bf16 %v501, %v499
    %v518 = vpack.c.bf16 %v502, %v500
    %v519 = vld [vmem:[%s6] sm:$0xff]
    %v520 = vld [vmem:[%s6 + $0x8] sm:$0xff]
    %v521 = vld [vmem:[%s6 + $0x10] sm:$0xff]
    %v522 = vld [vmem:[%s6 + $0x18] sm:$0xff]
    %v523 = vld [vmem:[%s6 + $0x20] sm:$0xff]
    %v524 = vld [vmem:[%s6 + $0x28] sm:$0xff]
    %v525 = vld [vmem:[%s6 + $0x30] sm:$0xff]
    %v526 = vld [vmem:[%s6 + $0x38] sm:$0xff]
    %528 = vset.pattern.permute.xlu0 0
    %529 = vperm.xlu0 %528, %v519
    %v530 = vpop.permute.xlu0 %529
    %533 = vset.pattern.permute.xlu0 0
    %534 = vperm.xlu0 %533, %v520
    %v535 = vpop.permute.xlu0 %534
    %538 = vset.pattern.permute.xlu0 0
    %539 = vperm.xlu0 %538, %v521
    %v540 = vpop.permute.xlu0 %539
    %543 = vset.pattern.permute.xlu0 0
    %544 = vperm.xlu0 %543, %v522
    %v545 = vpop.permute.xlu0 %544
    %548 = vset.pattern.permute.xlu0 0
    %549 = vperm.xlu0 %548, %v523
    %v550 = vpop.permute.xlu0 %549
    %553 = vset.pattern.permute.xlu0 0
    %554 = vperm.xlu0 %553, %v524
    %v555 = vpop.permute.xlu0 %554
    %558 = vset.pattern.permute.xlu0 0
    %559 = vperm.xlu0 %558, %v525
    %v560 = vpop.permute.xlu0 %559
    %563 = vset.pattern.permute.xlu0 0
    %564 = vperm.xlu0 %563, %v526
    %v565 = vpop.permute.xlu0 %564
    %v575 = vunpack.c.l.b16 %v503
    %v576 = vunpack.c.l.b16 %v504
    %v577 = vunpack.c.l.b16 %v505
    %v578 = vunpack.c.l.b16 %v506
    %v579 = vunpack.c.l.b16 %v507
    %v580 = vunpack.c.l.b16 %v508
    %v581 = vunpack.c.l.b16 %v509
    %v582 = vunpack.c.l.b16 %v510
    %v583 = vpack.c.b16 %v576, %v575
    %v584 = vpack.c.b16 %v578, %v577
    %v585 = vpack.c.b16 %v580, %v579
    %v586 = vpack.c.b16 %v582, %v581
    %vm587 = vcmask 523264
    %v589 = vsel %vm587, %v583, 0
    %v592 = vsel %vm587, %v584, 0
    %v595 = vsel %vm587, %v585, 0
    %v598 = vsel %vm587, %v586, 0
    %600 = vmatpush.bf16.msra.mxu0 0
    %601 = vmatpush.bf16.msra.mxu0 0
    %602 = vmatpush.bf16.msra.mxu0 0
    %603 = vmatpush.bf16.msra.mxu0 0
    %604 = vmatpush.bf16.msra.mxu0 %v517
    %605 = vmatpush.bf16.msra.mxu0 %v515
    %606 = vmatpush.bf16.msra.mxu0 %v513
    %607 = vmatpush.bf16.msra.mxu0 %v511
    %608 = vmatmul.bf16.gmra.mxu0 %v589
    %v609 = vpop.f32.mrf.mxu0
    %v610 = vadd.f32 %v530, %v609
    %v611 = vpop.f32.mrf.mxu0
    %v612 = vadd.f32 %v535, %v611
    %613 = vmatmul.bf16.gmra.mxu0 %v592
    %v614 = vpop.f32.mrf.mxu0
    %v615 = vadd.f32 %v540, %v614
    %v616 = vpop.f32.mrf.mxu0
    %v617 = vadd.f32 %v545, %v616
    %618 = vmatmul.bf16.gmra.mxu0 %v595
    %v619 = vpop.f32.mrf.mxu0
    %v620 = vadd.f32 %v550, %v619
    %v621 = vpop.f32.mrf.mxu0
    %v622 = vadd.f32 %v555, %v621
    %623 = vmatmul.bf16.gmra.mxu0 %v598
    %v624 = vpop.f32.mrf.mxu0
    %v625 = vadd.f32 %v560, %v624
    %v626 = vpop.f32.mrf.mxu0
    %v627 = vadd.f32 %v565, %v626
    %628 = vdwg.mxu0
    %629 = vmatpush.bf16.msra.mxu0 0
    %630 = vmatpush.bf16.msra.mxu0 0
    %631 = vmatpush.bf16.msra.mxu0 0
    %632 = vmatpush.bf16.msra.mxu0 0
    %633 = vmatpush.bf16.msra.mxu0 %v518
    %634 = vmatpush.bf16.msra.mxu0 %v516
    %635 = vmatpush.bf16.msra.mxu0 %v514
    %636 = vmatpush.bf16.msra.mxu0 %v512
    %637 = vmatmul.bf16.gmra.mxu0 %v589
    %v638 = vpop.f32.mrf.mxu0
    %v639 = vadd.f32 %v530, %v638
    %v640 = vpop.f32.mrf.mxu0
    %v641 = vadd.f32 %v535, %v640
    %642 = vmatmul.bf16.gmra.mxu0 %v592
    %v643 = vpop.f32.mrf.mxu0
    %v644 = vadd.f32 %v540, %v643
    %v645 = vpop.f32.mrf.mxu0
    %v646 = vadd.f32 %v545, %v645
    %647 = vmatmul.bf16.gmra.mxu0 %v595
    %v648 = vpop.f32.mrf.mxu0
    %v649 = vadd.f32 %v550, %v648
    %v650 = vpop.f32.mrf.mxu0
    %v651 = vadd.f32 %v555, %v650
    %652 = vmatmul.bf16.gmra.mxu0 %v598
    %v653 = vpop.f32.mrf.mxu0
    %v654 = vadd.f32 %v560, %v653
    %v655 = vpop.f32.mrf.mxu0
    %v656 = vadd.f32 %v565, %v655
    %657 = vdwg.mxu0
    %v658 = vtanh.pop %v610
    %v659 = vtanh.pop %v639
    %v660 = vtanh.pop %v612
    %v661 = vtanh.pop %v641
    %v662 = vtanh.pop %v615
    %v663 = vtanh.pop %v644
    %v664 = vtanh.pop %v617
    %v665 = vtanh.pop %v646
    %v666 = vtanh.pop %v620
    %v667 = vtanh.pop %v649
    %v668 = vtanh.pop %v622
    %v669 = vtanh.pop %v651
    %v670 = vtanh.pop %v625
    %v671 = vtanh.pop %v654
    %v672 = vtanh.pop %v627
    %v673 = vtanh.pop %v656
    %v674 = vld [vmem:[%s7] sm:$0x1]
    %v675 = vpack.c.bf16 %v660, %v658
    %v676 = vpack.c.bf16 %v661, %v659
    %v677 = vpack.c.bf16 %v664, %v662
    %v678 = vpack.c.bf16 %v665, %v663
    %v679 = vpack.c.bf16 %v668, %v666
    %v680 = vpack.c.bf16 %v669, %v667
    %v681 = vpack.c.bf16 %v672, %v670
    %v682 = vpack.c.bf16 %v673, %v671
    %v683 = vld [vmem:[#allocation2] sm:$0x1]
    %685 = vset.pattern.permute.xlu0 0
    %686 = vperm.xlu0 %685, %v683
    %v687 = vpop.permute.xlu0 %686
    %v689 = vperm.slane %v687, 0
    %v691 = vsel %vm587, %v674, 0
    %693 = vmatpush.bf16.msra.mxu0 0
    %694 = vmatpush.bf16.msra.mxu0 0
    %695 = vmatpush.bf16.msra.mxu0 0
    %696 = vmatpush.bf16.msra.mxu0 0
    %697 = vmatpush.bf16.msra.mxu0 %v681
    %698 = vmatpush.bf16.msra.mxu0 %v679
    %699 = vmatpush.bf16.msra.mxu0 %v677
    %700 = vmatpush.bf16.msra.mxu0 %v675
    %701 = vmatmul.bf16.gmra.mxu0 %v691
    %v702 = vpop.f32.mrf.mxu0
    %v703 = vadd.f32 %v689, %v702
    %v704 = vpop.f32.mrf.mxu0
    %705 = vdwg.mxu0
    %706 = vmatpush.bf16.msra.mxu0 0
    %707 = vmatpush.bf16.msra.mxu0 0
    %708 = vmatpush.bf16.msra.mxu0 0
    %709 = vmatpush.bf16.msra.mxu0 0
    %710 = vmatpush.bf16.msra.mxu0 %v682
    %711 = vmatpush.bf16.msra.mxu0 %v680
    %712 = vmatpush.bf16.msra.mxu0 %v678
    %713 = vmatpush.bf16.msra.mxu0 %v676
    %714 = vmatmul.bf16.gmra.mxu0 %v691
    %v715 = vpop.f32.mrf.mxu0
    %v716 = vadd.f32 %v689, %v715
    %v717 = vpop.f32.mrf.mxu0
    %718 = vdwg.mxu0
    %v719 = vsub.f32 0.0, %v703
    %v720 = vsub.f32 0.0, %v716
    %v721 = vmul.f32 %v719, 1.442695
    %v722 = vpow.pop %v721
    %v723 = vmul.f32 %v720, 1.442695
    %v724 = vpow.pop %v723
    %v725 = vadd.f32 %v722, 1.0
    %v726 = vadd.f32 %v724, 1.0
    %v727 = vrcp.pop %v725
    %v728 = vrcp.pop %v726
    %v731 = vrot.slane %v728, 7
    %vm732 = vcmask 1040384
    %v733 = vsel %vm732, %v727, %v731
    %v735 = vlaneseq
    %vm736 = vcmp.ge.s32.totalorder %v735, 0
    %vm737 = vcmp.lt.s32.totalorder %v735, 200
    %vm738 = vmand %vm736, %vm737
    %739 = vst.msk [vmem:[#allocation3] sm:$0x3] %vm738, %v733
    // Predicated region
    $region38: #{tpu_custom_call.1} parent=1 // pred_check
      _
    $region39: #{tpu_custom_call.1} parent=1 // pred_check_branch
      %741 = sbr.rel (0) target = $region41
    $region40: #{tpu_custom_call.1} parent=1 // pred_region
      %743 = vsyncadd [#allocation4], 0
      %s745 = sshll.u32 [#allocation3], 4
      %s746 = int_to_ptr.vmem [resolvable:$true] %s745
      %s747 = sshll.u32 %s9, 4
      %s748 = int_to_ptr.hbm [resolvable:$true] %s747
      %750 = dma.vmem_to_hbm [thread:$0]  %s746, 32, %s748, [#allocation4]
    $region41: #{tpu_custom_call.1} parent=1 // pred_fallthru
      _
    // Predicated region
    $region42: #{tpu_custom_call.1} parent=1 // pred_check
      _
    $region43: #{tpu_custom_call.1} parent=1 // pred_check_branch
      %752 = sbr.rel (0) target = $region45
    $region44: #{tpu_custom_call.1} parent=1 // pred_region
      %754 = dma.done [#allocation4], 32
    $region45: #{tpu_custom_call.1} parent=1 // pred_fallthru
      _
    %755 = vsyncpa [#allocation4], 1

</llo_original>
